<compile_context>
chip_gen: v6e
topology: v6e:2x2x1
jax: 0.10.0
libtpu: 0.0.40
codegen_flags: <defaults>
</compile_context>

<pallas_src>
import jax
import jax.numpy as jnp
from jax.experimental import pallas as pl
from jax.experimental.pallas import tpu as pltpu


def _round_up(x: int, m: int) -> int:
    return (x + m - 1) // m * m


def _make_mixup_ce_kernel(b_true: int, tb: int, lane_major: bool):
    def kernel(logits_ref, side_ref, d_ref):
        # Native-dtype logits are DMA'd; cast to f32 in VMEM for the math.
        x = logits_ref[...].astype(jnp.float32)               # [tb, C]
        side = side_ref[...]                                   # [tb, 4] int32
        t0 = side[:, 0:1]                                      # [tb, 1] int32
        t1 = side[:, 1:2]                                      # [tb, 1] int32
        lam = pltpu.bitcast(side[:, 2:3], jnp.float32)         # [tb, 1] f32

        # Stable log-sum-exp over the class (lane) axis.
        m = jnp.max(x, axis=-1, keepdims=True)                 # [tb, 1]
        z = x - m                                              # [tb, C]
        lse = jnp.log(jnp.sum(jnp.exp(z), axis=-1, keepdims=True))  # [tb, 1]

        # Mixup gather as two masked lane reductions (cheaper on the VPU than
        # materializing a weighted one-hot); combine on [tb,1] vectors.
        col = jax.lax.broadcasted_iota(jnp.int32, z.shape, 1)  # [tb, C]
        s0 = jnp.sum(jnp.where(col == t0, z, 0.0), axis=-1, keepdims=True)
        s1 = jnp.sum(jnp.where(col == t1, z, 0.0), axis=-1, keepdims=True)
        d = lse - (lam * s0 + (1.0 - lam) * s1)                # [tb, 1]

        # Zero padded / out-of-bounds batch rows.  The last (partial) block
        # reads unspecified rows from HBM; this mask is what makes that safe —
        # do not remove it.
        row = pl.program_id(0) * tb + jax.lax.broadcasted_iota(
            jnp.int32, (tb, 1), 0)
        d = jnp.where(row < b_true, d, 0.0)

        if lane_major:
            d_ref[...] = jnp.transpose(d)                      # (1, tb) lane-dense
        else:
            d_ref[...] = d                                     # (tb, 1) column

    return kernel


def mixup_loss(output, target, reduction: str = "mean", block_rows=None):
    """Pallas implementation of MixUpLoss(crit=CrossEntropyLoss).forward.

    output: [B, C] logits in their native dtype (f32 / bf16 / f16).
    target: either [B, 3] (idx0, idx1, lambda) or [B] integer labels.
            Integer class-id dtypes are accepted directly; float targets must
            hold exactly-representable integer class ids (as in the original).
    block_rows: optional row-tile override (testing / tuning knob).
    """
    output = jnp.asarray(output)
    target = jnp.asarray(target)
    B, C = output.shape

    # --- Pack side info: one (B, 4) int32 array = [t0, t1, bits(lam), 0]. ---
    if target.ndim == 2:
        t0 = target[:, 0].astype(jnp.int32)
        t1 = target[:, 1].astype(jnp.int32)
        lam = target[:, 2].astype(jnp.float32)
    else:
        # Plain CE path: mixup with t0 == t1 (lambda irrelevant, use 1).
        t0 = target.astype(jnp.int32)
        t1 = t0
        lam = jnp.ones((B,), jnp.float32)
    side = jnp.stack(
        [t0, t1, jax.lax.bitcast_convert_type(lam, jnp.int32),
         jnp.zeros((B,), jnp.int32)], axis=1)                  # (B, 4) int32

    # --- Generation-aware VMEM budget and byte-based tile sizing. ---
    itemsize = jnp.dtype(output.dtype).itemsize
    sub = {1: 32, 2: 16}.get(itemsize, 8)          # native sublane multiple
    try:
        vmem_cap = int(pltpu.get_tpu_info().vmem_capacity_bytes)
    except Exception:
        vmem_cap = 64 * 1024 * 1024                # conservative fallback
    phys = min(vmem_cap, 128 * 1024 * 1024)
    # v7x (64 MiB physical/TC): 48 MiB scoped limit; v5e/v6e (128 MiB): 64 MiB.
    vmem_limit = (48 if phys <= 64 * 1024 * 1024 else 64) * 1024 * 1024
    budget = vmem_limit - 8 * 1024 * 1024
    # Resident bytes per tile row: double-buffered native logits + ~4 f32
    # tile-sized temporaries (cast, z, exp, masked selects) + side/out slivers.
    per_row = 2 * C * itemsize + 4 * C * 4 + 64
    tb_fit = max(sub, (budget // per_row) // sub * sub)
    # Target ~8 MiB of native logits per block: amortizes the ~0.35 us/step
    # grid overhead (measured flat region of the HBM roofline).
    tb_target = max(sub, (8 * 1024 * 1024 // (C * itemsize)) // sub * sub)
    tb = min(tb_fit, tb_target)
    if block_rows is not None:
        tb = min(tb, max(sub, int(block_rows)))
    tb = max(sub, (tb // sub) * sub)

    B_ceil = _round_up(B, sub)
    if tb >= B_ceil:
        tb = B_ceil                                # single (possibly partial) tile
        num_tiles = 1
    else:
        if tb >= 128:
            tb = (tb // 128) * 128                 # lane-dense output wants %128
        num_tiles = pl.cdiv(B, tb)
    B_pad = num_tiles * tb
    # Lane-dense output blocks need last-dim % 128 == 0 unless single tile.
    lane_major = (num_tiles == 1) or (tb % 128 == 0)

    def _build(lane_major_flag: bool):
        kernel = _make_mixup_ce_kernel(B, tb, lane_major_flag)
        if lane_major_flag:
            out_shape = jax.ShapeDtypeStruct((1, B_pad), jnp.float32)
            out_spec = pl.BlockSpec((1, tb), lambda i: (0, i))
        else:
            out_shape = jax.ShapeDtypeStruct((B_pad, 1), jnp.float32)
            out_spec = pl.BlockSpec((tb, 1), lambda i: (i, 0))
        return pl.pallas_call(
            kernel,
            out_shape=out_shape,
            grid=(num_tiles,),
            in_specs=[
                pl.BlockSpec((tb, C), lambda i: (i, 0)),   # logits, native dtype
                pl.BlockSpec((tb, 4), lambda i: (i, 0)),   # packed (t0,t1,lam)
            ],
            out_specs=out_spec,
            compiler_params=pltpu.CompilerParams(
                dimension_semantics=("parallel",),
                vmem_limit_bytes=vmem_limit,
            ),
        )

    if lane_major:
        try:
            d = _build(True)(output, side)[0, :B]
        except Exception:
            # Safety net: if the (tb,1)->(1,tb) relayout does not lower on this
            # toolchain, fall back to the always-supported column layout.
            d = _build(False)(output, side)[:B, 0]
    else:
        d = _build(False)(output, side)[:B, 0]

    if reduction == "mean":
        return d.mean()            # divides by the true B (pad rows masked to 0)
    if reduction == "sum":
        return d.sum()
    return d


def _reference(output, target, reduction="mean"):
    """Pure-JAX reference for verification."""
    logp = jax.nn.log_softmax(output.astype(jnp.float32), axis=-1)
    if target.ndim == 2:
        t0 = target[:, 0].astype(jnp.int32)
        t1 = target[:, 1].astype(jnp.int32)
        lam = target[:, 2].astype(jnp.float32)
        l1 = -jnp.take_along_axis(logp, t0[:, None], axis=1)[:, 0]
        l2 = -jnp.take_along_axis(logp, t1[:, None], axis=1)[:, 0]
        d = l1 * lam + l2 * (1.0 - lam)
    else:
        t = target.astype(jnp.int32)
        d = -jnp.take_along_axis(logp, t[:, None], axis=1)[:, 0]
    if reduction == "mean":
        return d.mean()
    if reduction == "sum":
        return d.sum()
    return d


if __name__ == "__main__":
    key = jax.random.PRNGKey(0)
    k1, k2, k3, k4, k5 = jax.random.split(key, 5)

    B, C = 32, 128
    logits = jax.random.normal(k1, (B, C), dtype=jnp.float32)
    idx0 = jax.random.randint(k2, (B,), 0, C)
    idx1 = jax.random.randint(k3, (B,), 0, C)
    lam = jax.random.uniform(k4, (B,), dtype=jnp.float32)

    # mixup target: [B, 3] = (class_a, class_b, lambda)
    target = jnp.stack(
        [idx0.astype(jnp.float32), idx1.astype(jnp.float32), lam], axis=1
    )

    # All reductions, single-tile lane-dense path.
    for red in ("mean", "sum", "none"):
        got = jax.block_until_ready(mixup_loss(logits, target, reduction=red))
        ref = _reference(logits, target, reduction=red)
        assert jnp.allclose(got, ref, atol=1e-5, rtol=1e-5), (red, got, ref)

    # Multi-tile column-output fallback path (tiny row tile forces 4 steps).
    got = jax.block_until_ready(
        mixup_loss(logits, target, reduction="mean", block_rows=8))
    ref = _reference(logits, target, reduction="mean")
    assert jnp.allclose(got, ref, atol=1e-5, rtol=1e-5), (got, ref)

    # Ragged batch, no logits padding: partial last block + in-kernel mask.
    Br = 20
    for br in (None, 8):
        got = jax.block_until_ready(
            mixup_loss(logits[:Br], target[:Br], reduction="mean", block_rows=br))
        ref = _reference(logits[:Br], target[:Br], reduction="mean")
        assert jnp.allclose(got, ref, atol=1e-5, rtol=1e-5), (br, got, ref)

    # Multi-tile lane-dense path with a partial last block (B=300, tb=128).
    B2 = 300
    logits2 = jax.random.normal(k5, (B2, C), dtype=jnp.float32)
    target2 = jnp.stack(
        [jax.random.randint(k2, (B2,), 0, C).astype(jnp.float32),
         jax.random.randint(k3, (B2,), 0, C).astype(jnp.float32),
         jax.random.uniform(k4, (B2,), dtype=jnp.float32)], axis=1)
    got = jax.block_until_ready(
        mixup_loss(logits2, target2, reduction="mean", block_rows=128))
    ref = _reference(logits2, target2, reduction="mean")
    assert jnp.allclose(got, ref, atol=1e-5, rtol=1e-5), (got, ref)

    # 1-D target (plain cross-entropy) path.
    got1 = jax.block_until_ready(mixup_loss(logits, idx0, reduction="mean"))
    ref1 = _reference(logits, idx0, reduction="mean")
    assert jnp.allclose(got1, ref1, atol=1e-5, rtol=1e-5), (got1, ref1)

    # Native bf16 logits DMA'd as-is and cast to f32 inside the kernel.
    logits_bf16 = logits.astype(jnp.bfloat16)
    got_bf = jax.block_until_ready(
        mixup_loss(logits_bf16, target, reduction="mean"))
    ref_bf = _reference(logits_bf16.astype(jnp.float32), target,
                        reduction="mean")
    assert jnp.allclose(got_bf, ref_bf, atol=1e-3, rtol=1e-3), (got_bf, ref_bf)

    print("KERNEL_OK")
</pallas_src>

<mosaic_0001>
module attributes {stable_mosaic.version = 11 : i64} {
  func.func @kernel(%arg0: i32, %arg1: memref<32x128xf32, #tpu.memory_space<vmem>>, %arg2: memref<32x4xi32, #tpu.memory_space<vmem>>, %arg3: memref<1x32xf32, #tpu.memory_space<vmem>>) attributes {dimension_semantics = [#tpu.dimension_semantics<parallel>], iteration_bounds = array<i64: 1>, scalar_prefetch = 0 : i64, scratch_operands = 0 : i64, tpu.core_type = #tpu.core_type<tc>, window_params = [{transform_indices = @transform_0, window_bounds = array<i64: 32, 128>}, {transform_indices = @transform_1, window_bounds = array<i64: 32, 4>}, {transform_indices = @transform_2, window_bounds = array<i64: 1, 32>}]} {
    %c0 = arith.constant 0 : index
    %c0_0 = arith.constant 0 : index
    %0 = vector.load %arg1[%c0, %c0_0] : memref<32x128xf32, #tpu.memory_space<vmem>>, vector<32x128xf32>
    %c0_1 = arith.constant 0 : index
    %c0_2 = arith.constant 0 : index
    %1 = vector.load %arg2[%c0_1, %c0_2] : memref<32x4xi32, #tpu.memory_space<vmem>>, vector<32x4xi32>
    %2 = vector.extract_strided_slice %1 {offsets = [0, 0], sizes = [32, 1], strides = [1, 1]} : vector<32x4xi32> to vector<32x1xi32>
    %3 = vector.extract_strided_slice %1 {offsets = [0, 1], sizes = [32, 1], strides = [1, 1]} : vector<32x4xi32> to vector<32x1xi32>
    %4 = vector.extract_strided_slice %1 {offsets = [0, 2], sizes = [32, 1], strides = [1, 1]} : vector<32x4xi32> to vector<32x1xi32>
    %5 = tpu.bitcast %4 : vector<32x1xi32> -> vector<32x1xf32>
    %cst = arith.constant dense<0xFF800000> : vector<32xf32>
    %6 = vector.multi_reduction <maximumf>, %0, %cst [1] : vector<32x128xf32> to vector<32xf32>
    %7 = vector.shape_cast %6 : vector<32xf32> to vector<32x1xf32>
    %8 = vector.broadcast %7 : vector<32x1xf32> to vector<32x128xf32>
    %9 = arith.subf %0, %8 : vector<32x128xf32>
    %10 = math.exp %9 : vector<32x128xf32>
    %cst_3 = arith.constant dense<0.000000e+00> : vector<32xf32>
    %11 = vector.multi_reduction <add>, %10, %cst_3 [1] : vector<32x128xf32> to vector<32xf32>
    %12 = vector.shape_cast %11 : vector<32xf32> to vector<32x1xf32>
    %13 = math.log %12 : vector<32x1xf32>
    %14 = tpu.iota {dimensions = array<i32: 1>} : vector<32x128xi32>
    %15 = vector.broadcast %2 : vector<32x1xi32> to vector<32x128xi32>
    %16 = arith.cmpi eq, %14, %15 : vector<32x128xi32>
    %cst_4 = arith.constant 0.000000e+00 : f32
    %17 = vector.broadcast %cst_4 : f32 to vector<32x128xf32>
    %18 = arith.select %16, %9, %17 : vector<32x128xi1>, vector<32x128xf32>
    %cst_5 = arith.constant dense<0.000000e+00> : vector<32xf32>
    %19 = vector.multi_reduction <add>, %18, %cst_5 [1] : vector<32x128xf32> to vector<32xf32>
    %20 = vector.shape_cast %19 : vector<32xf32> to vector<32x1xf32>
    %21 = vector.broadcast %3 : vector<32x1xi32> to vector<32x128xi32>
    %22 = arith.cmpi eq, %14, %21 : vector<32x128xi32>
    %cst_6 = arith.constant 0.000000e+00 : f32
    %23 = vector.broadcast %cst_6 : f32 to vector<32x128xf32>
    %24 = arith.select %22, %9, %23 : vector<32x128xi1>, vector<32x128xf32>
    %cst_7 = arith.constant dense<0.000000e+00> : vector<32xf32>
    %25 = vector.multi_reduction <add>, %24, %cst_7 [1] : vector<32x128xf32> to vector<32xf32>
    %26 = vector.shape_cast %25 : vector<32xf32> to vector<32x1xf32>
    %27 = arith.mulf %5, %20 : vector<32x1xf32>
    %cst_8 = arith.constant 1.000000e+00 : f32
    %28 = vector.broadcast %cst_8 : f32 to vector<32x1xf32>
    %29 = arith.subf %28, %5 : vector<32x1xf32>
    %30 = arith.mulf %29, %26 : vector<32x1xf32>
    %31 = arith.addf %27, %30 : vector<32x1xf32>
    %32 = arith.subf %13, %31 : vector<32x1xf32>
    %c32_i32 = arith.constant 32 : i32
    %33 = arith.muli %arg0, %c32_i32 : i32
    %34 = tpu.iota {dimensions = array<i32: 0>} : vector<32x1xi32>
    %35 = vector.broadcast %33 : i32 to vector<32x1xi32>
    %36 = arith.addi %35, %34 : vector<32x1xi32>
    %c32_i32_9 = arith.constant 32 : i32
    %37 = vector.broadcast %c32_i32_9 : i32 to vector<32x1xi32>
    %38 = arith.cmpi slt, %36, %37 : vector<32x1xi32>
    %cst_10 = arith.constant 0.000000e+00 : f32
    %39 = vector.broadcast %cst_10 : f32 to vector<32x1xf32>
    %40 = arith.select %38, %32, %39 : vector<32x1xi1>, vector<32x1xf32>
    %41 = tpu.transpose %40, [1, 0] : vector<32x1xf32> -> vector<1x32xf32>
    %c0_11 = arith.constant 0 : index
    %c0_12 = arith.constant 0 : index
    %42 = vector.load %arg3[%c0_11, %c0_12] : memref<1x32xf32, #tpu.memory_space<vmem>>, vector<1x32xf32>
    tpu.vector_store %arg3[%c0_11, %c0_12], %41 {strides = array<i32>} : memref<1x32xf32, #tpu.memory_space<vmem>>, vector<1x32xf32>,
    return
  }
  func.func @transform_0(%arg0: i32) -> (i32, i32) {
    %c0_i32 = arith.constant 0 : i32
    %c0_i32_0 = arith.constant 0 : i32
    return %arg0, %c0_i32 : i32, i32
  }
  func.func @transform_1(%arg0: i32) -> (i32, i32) {
    %c0_i32 = arith.constant 0 : i32
    %c0_i32_0 = arith.constant 0 : i32
    return %arg0, %c0_i32 : i32, i32
  }
  func.func @transform_2(%arg0: i32) -> (i32, i32) {
    %c0_i32 = arith.constant 0 : i32
    %c0_i32_0 = arith.constant 0 : i32
    return %c0_i32, %arg0 : i32, i32
  }
}

module attributes {stable_mosaic.version = 11 : i64} {
  func.func @kernel(%arg0: i32, %arg1: memref<32x128xf32, #tpu.memory_space<vmem>>, %arg2: memref<32x4xi32, #tpu.memory_space<vmem>>, %arg3: memref<32x1xf32, #tpu.memory_space<vmem>>) attributes {dimension_semantics = [#tpu.dimension_semantics<parallel>], iteration_bounds = array<i64: 1>, scalar_prefetch = 0 : i64, scratch_operands = 0 : i64, tpu.core_type = #tpu.core_type<tc>, window_params = [{transform_indices = @transform_0, window_bounds = array<i64: 32, 128>}, {transform_indices = @transform_1, window_bounds = array<i64: 32, 4>}, {transform_indices = @transform_2, window_bounds = array<i64: 32, 1>}]} {
    %c0 = arith.constant 0 : index
    %c0_0 = arith.constant 0 : index
    %0 = vector.load %arg1[%c0, %c0_0] : memref<32x128xf32, #tpu.memory_space<vmem>>, vector<32x128xf32>
    %c0_1 = arith.constant 0 : index
    %c0_2 = arith.constant 0 : index
    %1 = vector.load %arg2[%c0_1, %c0_2] : memref<32x4xi32, #tpu.memory_space<vmem>>, vector<32x4xi32>
    %2 = vector.extract_strided_slice %1 {offsets = [0, 0], sizes = [32, 1], strides = [1, 1]} : vector<32x4xi32> to vector<32x1xi32>
    %3 = vector.extract_strided_slice %1 {offsets = [0, 1], sizes = [32, 1], strides = [1, 1]} : vector<32x4xi32> to vector<32x1xi32>
    %4 = vector.extract_strided_slice %1 {offsets = [0, 2], sizes = [32, 1], strides = [1, 1]} : vector<32x4xi32> to vector<32x1xi32>
    %5 = tpu.bitcast %4 : vector<32x1xi32> -> vector<32x1xf32>
    %cst = arith.constant dense<0xFF800000> : vector<32xf32>
    %6 = vector.multi_reduction <maximumf>, %0, %cst [1] : vector<32x128xf32> to vector<32xf32>
    %7 = vector.shape_cast %6 : vector<32xf32> to vector<32x1xf32>
    %8 = vector.broadcast %7 : vector<32x1xf32> to vector<32x128xf32>
    %9 = arith.subf %0, %8 : vector<32x128xf32>
    %10 = math.exp %9 : vector<32x128xf32>
    %cst_3 = arith.constant dense<0.000000e+00> : vector<32xf32>
    %11 = vector.multi_reduction <add>, %10, %cst_3 [1] : vector<32x128xf32> to vector<32xf32>
    %12 = vector.shape_cast %11 : vector<32xf32> to vector<32x1xf32>
    %13 = math.log %12 : vector<32x1xf32>
    %14 = tpu.iota {dimensions = array<i32: 1>} : vector<32x128xi32>
    %15 = vector.broadcast %2 : vector<32x1xi32> to vector<32x128xi32>
    %16 = arith.cmpi eq, %14, %15 : vector<32x128xi32>
    %cst_4 = arith.constant 0.000000e+00 : f32
    %17 = vector.broadcast %cst_4 : f32 to vector<32x128xf32>
    %18 = arith.select %16, %9, %17 : vector<32x128xi1>, vector<32x128xf32>
    %cst_5 = arith.constant dense<0.000000e+00> : vector<32xf32>
    %19 = vector.multi_reduction <add>, %18, %cst_5 [1] : vector<32x128xf32> to vector<32xf32>
    %20 = vector.shape_cast %19 : vector<32xf32> to vector<32x1xf32>
    %21 = vector.broadcast %3 : vector<32x1xi32> to vector<32x128xi32>
    %22 = arith.cmpi eq, %14, %21 : vector<32x128xi32>
    %cst_6 = arith.constant 0.000000e+00 : f32
    %23 = vector.broadcast %cst_6 : f32 to vector<32x128xf32>
    %24 = arith.select %22, %9, %23 : vector<32x128xi1>, vector<32x128xf32>
    %cst_7 = arith.constant dense<0.000000e+00> : vector<32xf32>
    %25 = vector.multi_reduction <add>, %24, %cst_7 [1] : vector<32x128xf32> to vector<32xf32>
    %26 = vector.shape_cast %25 : vector<32xf32> to vector<32x1xf32>
    %27 = arith.mulf %5, %20 : vector<32x1xf32>
    %cst_8 = arith.constant 1.000000e+00 : f32
    %28 = vector.broadcast %cst_8 : f32 to vector<32x1xf32>
    %29 = arith.subf %28, %5 : vector<32x1xf32>
    %30 = arith.mulf %29, %26 : vector<32x1xf32>
    %31 = arith.addf %27, %30 : vector<32x1xf32>
    %32 = arith.subf %13, %31 : vector<32x1xf32>
    %c32_i32 = arith.constant 32 : i32
    %33 = arith.muli %arg0, %c32_i32 : i32
    %34 = tpu.iota {dimensions = array<i32: 0>} : vector<32x1xi32>
    %35 = vector.broadcast %33 : i32 to vector<32x1xi32>
    %36 = arith.addi %35, %34 : vector<32x1xi32>
    %c32_i32_9 = arith.constant 32 : i32
    %37 = vector.broadcast %c32_i32_9 : i32 to vector<32x1xi32>
    %38 = arith.cmpi slt, %36, %37 : vector<32x1xi32>
    %cst_10 = arith.constant 0.000000e+00 : f32
    %39 = vector.broadcast %cst_10 : f32 to vector<32x1xf32>
    %40 = arith.select %38, %32, %39 : vector<32x1xi1>, vector<32x1xf32>
    %c0_11 = arith.constant 0 : index
    %c0_12 = arith.constant 0 : index
    %41 = vector.load %arg3[%c0_11, %c0_12] : memref<32x1xf32, #tpu.memory_space<vmem>>, vector<32x1xf32>
    tpu.vector_store %arg3[%c0_11, %c0_12], %40 {strides = array<i32>} : memref<32x1xf32, #tpu.memory_space<vmem>>, vector<32x1xf32>,
    return
  }
  func.func @transform_0(%arg0: i32) -> (i32, i32) {
    %c0_i32 = arith.constant 0 : i32
    %c0_i32_0 = arith.constant 0 : i32
    return %arg0, %c0_i32 : i32, i32
  }
  func.func @transform_1(%arg0: i32) -> (i32, i32) {
    %c0_i32 = arith.constant 0 : i32
    %c0_i32_0 = arith.constant 0 : i32
    return %arg0, %c0_i32 : i32, i32
  }
  func.func @transform_2(%arg0: i32) -> (i32, i32) {
    %c0_i32 = arith.constant 0 : i32
    %c0_i32_0 = arith.constant 0 : i32
    return %arg0, %c0_i32 : i32, i32
  }
}

</mosaic_0001>

<llo_original>
// kernel: tpu_custom_call.1
$region0: #{tpu_custom_call.1}
  #allocation0 [shape = 'u32[]', space=smem, size = 0x4, offset = 0x4, fixed_abs, tag = 'smem constant byte address 0x4 - core index']
  #allocation1 [shape = 'u32[144,128]{1,0:T(1,128)}', space=vmem, size = 0x12000, scoped, tag = 'internal scratch']
  %s0 = inlined_call_operand.vmem [shape: f32[32,128], index: 0, kind: input, shape index: {}]
  %s1 = inlined_call_operand.vmem [shape: s32[32,4], index: 1, kind: input, shape index: {}]
  %s2 = inlined_call_operand.hbm [shape: f32[1,32], index: 2, kind: output, shape index: {}]
  %s3 = sld [smem:[#allocation0]]
  $region18: #{tpu_custom_call.1} parent=0
    _
  %s5 = ssub.s32 1, %s3
  %s6 = scalar_select 0, %s5, %s3
  $region1: #{tpu_custom_call.1} parent=0
    #allocation2 [shape = 'u8[512]{0}', space=vmem, size = 0x400, scoped, tag = 'output window, operand 0, single buffered']
    #allocation3 [shape = 's32[1]{0}', space=sflag, size = 0x4, scoped, tag = 'scoped memory for tpu_custom_call.1']
    %7 = vsyncpa [#allocation3], 0
    // Predicated region
    $region2: #{tpu_custom_call.1} parent=1 // pred_check
      _
    $region3: #{tpu_custom_call.1} parent=1 // pred_check_branch
      %9 = sbr.rel (0) target = $region5
    $region4: #{tpu_custom_call.1} parent=1 // pred_region
      _
    $region5: #{tpu_custom_call.1} parent=1 // pred_fallthru
      _
    // Predicated region
    $region6: #{tpu_custom_call.1} parent=1 // pred_check
      _
    $region7: #{tpu_custom_call.1} parent=1 // pred_check_branch
      %11 = sbr.rel (0) target = $region9
    $region8: #{tpu_custom_call.1} parent=1 // pred_region
      _
    $region9: #{tpu_custom_call.1} parent=1 // pred_fallthru
      _
    %v12 = vld [vmem:[%s0] sm:$0xff]
    %v13 = vld [vmem:[%s0 + $0x8] sm:$0xff]
    %v14 = vld [vmem:[%s0 + $0x10] sm:$0xff]
    %v15 = vld [vmem:[%s0 + $0x18] sm:$0xff]
    %v16 = vld [vmem:[%s1] sm:$0xff]
    %v17 = vld [vmem:[%s1 + $0x8] sm:$0xff]
    %v18 = vld [vmem:[%s1 + $0x10] sm:$0xff]
    %v19 = vld [vmem:[%s1 + $0x18] sm:$0xff]
    %24 = vmax.xlane.f32.xlu0 %v12
    %v25 = vpop.xlane.xlu0 %24
    %26 = vmax.xlane.f32.xlu0 %v13
    %v27 = vpop.xlane.xlu0 %26
    %28 = vmax.xlane.f32.xlu0 %v14
    %v29 = vpop.xlane.xlu0 %28
    %30 = vmax.xlane.f32.xlu0 %v15
    %v31 = vpop.xlane.xlu0 %30
    %v32 = vsub.f32 %v12, %v25
    %v33 = vsub.f32 %v13, %v27
    %v34 = vsub.f32 %v14, %v29
    %v35 = vsub.f32 %v15, %v31
    %v36 = vmul.f32 %v32, 1.442695
    %v37 = vpow.pop %v36
    %v38 = vmul.f32 %v33, 1.442695
    %v39 = vpow.pop %v38
    %v40 = vmul.f32 %v34, 1.442695
    %v41 = vpow.pop %v40
    %v42 = vmul.f32 %v35, 1.442695
    %v43 = vpow.pop %v42
    %44 = vadd.xlane.f32.xlu0 %v37
    %v45 = vpop.xlane.xlu0 %44
    %46 = vadd.xlane.f32.xlu0 %v39
    %v47 = vpop.xlane.xlu0 %46
    %48 = vadd.xlane.f32.xlu0 %v41
    %v49 = vpop.xlane.xlu0 %48
    %50 = vadd.xlane.f32.xlu0 %v43
    %v51 = vpop.xlane.xlu0 %50
    %v52 = vlog2.pop %v45
    %v53 = vmul.f32 %v52, 0.6931472
    %v54 = vlog2.pop %v47
    %v55 = vmul.f32 %v54, 0.6931472
    %v56 = vlog2.pop %v49
    %v57 = vmul.f32 %v56, 0.6931472
    %v58 = vlog2.pop %v51
    %v59 = vmul.f32 %v58, 0.6931472
    %v60 = vlaneseq
    %v61 = vand.u32 %v60, 127
    %62 = vset.pattern.permute.xlu0 0
    %63 = vperm.xlu0 %62, %v16
    %v64 = vpop.permute.xlu0 %63
    %65 = vset.pattern.permute.xlu0 0
    %66 = vperm.xlu0 %65, %v17
    %v67 = vpop.permute.xlu0 %66
    %68 = vset.pattern.permute.xlu0 0
    %69 = vperm.xlu0 %68, %v18
    %v70 = vpop.permute.xlu0 %69
    %71 = vset.pattern.permute.xlu0 0
    %72 = vperm.xlu0 %71, %v19
    %v73 = vpop.permute.xlu0 %72
    %vm74 = vcmp.eq.s32.totalorder %v61, %v64
    %vm75 = vcmp.eq.s32.totalorder %v61, %v67
    %vm76 = vcmp.eq.s32.totalorder %v61, %v70
    %vm77 = vcmp.eq.s32.totalorder %v61, %v73
    %v78 = vsel %vm74, %v32, 0.0
    %v79 = vsel %vm75, %v33, 0.0
    %v80 = vsel %vm76, %v34, 0.0
    %v81 = vsel %vm77, %v35, 0.0
    %82 = vadd.xlane.f32.xlu0 %v78
    %v83 = vpop.xlane.xlu0 %82
    %84 = vadd.xlane.f32.xlu0 %v79
    %v85 = vpop.xlane.xlu0 %84
    %86 = vadd.xlane.f32.xlu0 %v80
    %v87 = vpop.xlane.xlu0 %86
    %88 = vadd.xlane.f32.xlu0 %v81
    %v89 = vpop.xlane.xlu0 %88
    %90 = vset.pattern.permute.xlu0 1
    %91 = vperm.xlu0 %90, %v16
    %v92 = vpop.permute.xlu0 %91
    %93 = vset.pattern.permute.xlu0 1
    %94 = vperm.xlu0 %93, %v17
    %v95 = vpop.permute.xlu0 %94
    %96 = vset.pattern.permute.xlu0 1
    %97 = vperm.xlu0 %96, %v18
    %v98 = vpop.permute.xlu0 %97
    %99 = vset.pattern.permute.xlu0 1
    %100 = vperm.xlu0 %99, %v19
    %v101 = vpop.permute.xlu0 %100
    %vm102 = vcmp.eq.s32.totalorder %v61, %v92
    %vm103 = vcmp.eq.s32.totalorder %v61, %v95
    %vm104 = vcmp.eq.s32.totalorder %v61, %v98
    %vm105 = vcmp.eq.s32.totalorder %v61, %v101
    %v106 = vsel %vm102, %v32, 0.0
    %v107 = vsel %vm103, %v33, 0.0
    %v108 = vsel %vm104, %v34, 0.0
    %v109 = vsel %vm105, %v35, 0.0
    %110 = vadd.xlane.f32.xlu0 %v106
    %v111 = vpop.xlane.xlu0 %110
    %112 = vadd.xlane.f32.xlu0 %v107
    %v113 = vpop.xlane.xlu0 %112
    %114 = vadd.xlane.f32.xlu0 %v108
    %v115 = vpop.xlane.xlu0 %114
    %116 = vadd.xlane.f32.xlu0 %v109
    %v117 = vpop.xlane.xlu0 %116
    %v118 = vmul.f32 %v16, %v83
    %v119 = vmul.f32 %v17, %v85
    %v120 = vmul.f32 %v18, %v87
    %v121 = vmul.f32 %v19, %v89
    %v122 = vsub.f32 1.0, %v16
    %v123 = vsub.f32 1.0, %v17
    %v124 = vsub.f32 1.0, %v18
    %v125 = vsub.f32 1.0, %v19
    %v126 = vmul.f32 %v122, %v111
    %v127 = vmul.f32 %v123, %v113
    %v128 = vmul.f32 %v124, %v115
    %v129 = vmul.f32 %v125, %v117
    %v130 = vadd.f32 %v118, %v126
    %v131 = vadd.f32 %v119, %v127
    %v132 = vadd.f32 %v120, %v128
    %v133 = vadd.f32 %v121, %v129
    %v134 = vsub.f32 %v53, %v130
    %v135 = vsub.f32 %v55, %v131
    %v136 = vsub.f32 %v57, %v132
    %v137 = vsub.f32 %v59, %v133
    %s138 = smul.u32 0, 32
    %v139 = vlaneseq
    %v140 = vshrl.u32 %v139, 7
    %v141 = vadd.s32 %v140, 8
    %v142 = vadd.s32 %v140, 16
    %v143 = vadd.s32 %v140, 24
    %v144 = vstv %s138
    %v145 = vadd.s32 %v144, %v140
    %v146 = vadd.s32 %v144, %v141
    %v147 = vadd.s32 %v144, %v142
    %v148 = vadd.s32 %v144, %v143
    %vm149 = vcmp.lt.s32.totalorder %v145, 32
    %vm150 = vcmp.lt.s32.totalorder %v146, 32
    %vm151 = vcmp.lt.s32.totalorder %v147, 32
    %vm152 = vcmp.lt.s32.totalorder %v148, 32
    %v153 = vsel %vm149, %v134, 0.0
    %v154 = vsel %vm150, %v135, 0.0
    %v155 = vsel %vm151, %v136, 0.0
    %v156 = vsel %vm152, %v137, 0.0
    %161 = vrot.lane.b32.xlu0 %v153, 126
    %v162 = vpop.permute.xlu0 %161
    %163 = vrot.lane.b32.xlu0 %v154, 126
    %v164 = vpop.permute.xlu0 %163
    %165 = vrot.lane.b32.xlu0 %v155, 126
    %v166 = vpop.permute.xlu0 %165
    %167 = vrot.lane.b32.xlu0 %v156, 126
    %v168 = vpop.permute.xlu0 %167
    %173 = vxpose.xlu0.b32.start [1/16] %v162, 128
    %174 = vxpose.xlu0.b32.cont [2/16] %v164, 128
    %175 = vxpose.xlu0.b32.cont [3/16] %v166, 128
    %176 = vxpose.xlu0.b32.cont [4/16] %v168, 128
    %177 = vxpose.xlu0.b32.cont [5/16] 0.0, 128
    %178 = vxpose.xlu0.b32.cont [6/16] 0.0, 128
    %179 = vxpose.xlu0.b32.cont [7/16] 0.0, 128
    %180 = vxpose.xlu0.b32.cont [8/16] 0.0, 128
    %181 = vxpose.xlu0.b32.cont [9/16] 0.0, 128
    %182 = vxpose.xlu0.b32.cont [10/16] 0.0, 128
    %183 = vxpose.xlu0.b32.cont [11/16] 0.0, 128
    %184 = vxpose.xlu0.b32.cont [12/16] 0.0, 128
    %185 = vxpose.xlu0.b32.cont [13/16] 0.0, 128
    %186 = vxpose.xlu0.b32.cont [14/16] 0.0, 128
    %187 = vxpose.xlu0.b32.cont [15/16] 0.0, 128
    %188 = vxpose.xlu0.b32.end [16/16] 0.0, 128
    %v189 = vpop.trf.xlu0
    %v190 = vpop.trf.xlu0
    %v191 = vpop.trf.xlu0
    %v192 = vpop.trf.xlu0
    %v193 = vpop.trf.xlu0
    %v194 = vpop.trf.xlu0
    %v195 = vpop.trf.xlu0
    %v196 = vpop.trf.xlu0
    %v197 = vpop.trf.xlu0
    %v198 = vpop.trf.xlu0
    %v199 = vpop.trf.xlu0
    %v200 = vpop.trf.xlu0
    %v201 = vpop.trf.xlu0
    %v202 = vpop.trf.xlu0
    %v203 = vpop.trf.xlu0
    %v204 = vpop.trf.xlu0
    %vm205 = vcmask 253952
    %206 = vst.msk [vmem:[#allocation2] sm:$0x1] %vm205, %v189
    // Predicated region
    $region10: #{tpu_custom_call.1} parent=1 // pred_check
      _
    $region11: #{tpu_custom_call.1} parent=1 // pred_check_branch
      %208 = sbr.rel (0) target = $region13
    $region12: #{tpu_custom_call.1} parent=1 // pred_region
      %s210 = ssub.s32 16, 16
      %211 = vsyncadd [#allocation3], %s210
      %s213 = sshll.u32 [#allocation2], 4
      %s214 = int_to_ptr.vmem [resolvable:$true] %s213
      %216 = dma.vmem_to_hbm [thread:$0]  %s214, 16, %s2, [#allocation3]
    $region13: #{tpu_custom_call.1} parent=1 // pred_fallthru
      _
    // Predicated region
    $region14: #{tpu_custom_call.1} parent=1 // pred_check
      _
    $region15: #{tpu_custom_call.1} parent=1 // pred_check_branch
      %218 = sbr.rel (0) target = $region17
    $region16: #{tpu_custom_call.1} parent=1 // pred_region
      %219 = dma.done [#allocation3], 16
    $region17: #{tpu_custom_call.1} parent=1 // pred_fallthru
      _
    %220 = vsyncpa [#allocation3], 1

// kernel: tpu_custom_call.1
$region0: #{tpu_custom_call.1}
  #allocation0 [shape = 'u32[]', space=smem, size = 0x4, offset = 0x4, fixed_abs, tag = 'smem constant byte address 0x4 - core index']
  #allocation1 [shape = 'u32[144,128]{1,0:T(1,128)}', space=vmem, size = 0x12000, scoped, tag = 'internal scratch']
  %s0 = inlined_call_operand.vmem [shape: f32[32,128], index: 0, kind: input, shape index: {}]
  %s1 = inlined_call_operand.vmem [shape: s32[32,4], index: 1, kind: input, shape index: {}]
  %s2 = inlined_call_operand.vmem [shape: f32[32,1], index: 2, kind: output, shape index: {}]
  %s3 = sld [smem:[#allocation0]]
  $region18: #{tpu_custom_call.1} parent=0
    _
  %s5 = ssub.s32 1, %s3
  %s6 = scalar_select 0, %s5, %s3
  // Predicated region
  $region2: #{tpu_custom_call.1} parent=0 // pred_check
    _
  $region3: #{tpu_custom_call.1} parent=0 // pred_check_branch
    %8 = sbr.rel (0) target = $region5
  $region4: #{tpu_custom_call.1} parent=0 // pred_region
    _
  $region5: #{tpu_custom_call.1} parent=0 // pred_fallthru
    _
  // Predicated region
  $region6: #{tpu_custom_call.1} parent=0 // pred_check
    _
  $region7: #{tpu_custom_call.1} parent=0 // pred_check_branch
    %10 = sbr.rel (0) target = $region9
  $region8: #{tpu_custom_call.1} parent=0 // pred_region
    _
  $region9: #{tpu_custom_call.1} parent=0 // pred_fallthru
    _
  %v11 = vld [vmem:[%s0] sm:$0xff]
  %v12 = vld [vmem:[%s0 + $0x8] sm:$0xff]
  %v13 = vld [vmem:[%s0 + $0x10] sm:$0xff]
  %v14 = vld [vmem:[%s0 + $0x18] sm:$0xff]
  %v15 = vld [vmem:[%s1] sm:$0xff]
  %v16 = vld [vmem:[%s1 + $0x8] sm:$0xff]
  %v17 = vld [vmem:[%s1 + $0x10] sm:$0xff]
  %v18 = vld [vmem:[%s1 + $0x18] sm:$0xff]
  %23 = vmax.xlane.f32.xlu0 %v11
  %v24 = vpop.xlane.xlu0 %23
  %25 = vmax.xlane.f32.xlu0 %v12
  %v26 = vpop.xlane.xlu0 %25
  %27 = vmax.xlane.f32.xlu0 %v13
  %v28 = vpop.xlane.xlu0 %27
  %29 = vmax.xlane.f32.xlu0 %v14
  %v30 = vpop.xlane.xlu0 %29
  %v31 = vsub.f32 %v11, %v24
  %v32 = vsub.f32 %v12, %v26
  %v33 = vsub.f32 %v13, %v28
  %v34 = vsub.f32 %v14, %v30
  %v35 = vmul.f32 %v31, 1.442695
  %v36 = vpow.pop %v35
  %v37 = vmul.f32 %v32, 1.442695
  %v38 = vpow.pop %v37
  %v39 = vmul.f32 %v33, 1.442695
  %v40 = vpow.pop %v39
  %v41 = vmul.f32 %v34, 1.442695
  %v42 = vpow.pop %v41
  %43 = vadd.xlane.f32.xlu0 %v36
  %v44 = vpop.xlane.xlu0 %43
  %45 = vadd.xlane.f32.xlu0 %v38
  %v46 = vpop.xlane.xlu0 %45
  %47 = vadd.xlane.f32.xlu0 %v40
  %v48 = vpop.xlane.xlu0 %47
  %49 = vadd.xlane.f32.xlu0 %v42
  %v50 = vpop.xlane.xlu0 %49
  %v51 = vlog2.pop %v44
  %v52 = vmul.f32 %v51, 0.6931472
  %v53 = vlog2.pop %v46
  %v54 = vmul.f32 %v53, 0.6931472
  %v55 = vlog2.pop %v48
  %v56 = vmul.f32 %v55, 0.6931472
  %v57 = vlog2.pop %v50
  %v58 = vmul.f32 %v57, 0.6931472
  %v59 = vlaneseq
  %v60 = vand.u32 %v59, 127
  %61 = vset.pattern.permute.xlu0 0
  %62 = vperm.xlu0 %61, %v15
  %v63 = vpop.permute.xlu0 %62
  %64 = vset.pattern.permute.xlu0 0
  %65 = vperm.xlu0 %64, %v16
  %v66 = vpop.permute.xlu0 %65
  %67 = vset.pattern.permute.xlu0 0
  %68 = vperm.xlu0 %67, %v17
  %v69 = vpop.permute.xlu0 %68
  %70 = vset.pattern.permute.xlu0 0
  %71 = vperm.xlu0 %70, %v18
  %v72 = vpop.permute.xlu0 %71
  %vm73 = vcmp.eq.s32.totalorder %v60, %v63
  %vm74 = vcmp.eq.s32.totalorder %v60, %v66
  %vm75 = vcmp.eq.s32.totalorder %v60, %v69
  %vm76 = vcmp.eq.s32.totalorder %v60, %v72
  %v77 = vsel %vm73, %v31, 0.0
  %v78 = vsel %vm74, %v32, 0.0
  %v79 = vsel %vm75, %v33, 0.0
  %v80 = vsel %vm76, %v34, 0.0
  %81 = vadd.xlane.f32.xlu0 %v77
  %v82 = vpop.xlane.xlu0 %81
  %83 = vadd.xlane.f32.xlu0 %v78
  %v84 = vpop.xlane.xlu0 %83
  %85 = vadd.xlane.f32.xlu0 %v79
  %v86 = vpop.xlane.xlu0 %85
  %87 = vadd.xlane.f32.xlu0 %v80
  %v88 = vpop.xlane.xlu0 %87
  %89 = vset.pattern.permute.xlu0 1
  %90 = vperm.xlu0 %89, %v15
  %v91 = vpop.permute.xlu0 %90
  %92 = vset.pattern.permute.xlu0 1
  %93 = vperm.xlu0 %92, %v16
  %v94 = vpop.permute.xlu0 %93
  %95 = vset.pattern.permute.xlu0 1
  %96 = vperm.xlu0 %95, %v17
  %v97 = vpop.permute.xlu0 %96
  %98 = vset.pattern.permute.xlu0 1
  %99 = vperm.xlu0 %98, %v18
  %v100 = vpop.permute.xlu0 %99
  %vm101 = vcmp.eq.s32.totalorder %v60, %v91
  %vm102 = vcmp.eq.s32.totalorder %v60, %v94
  %vm103 = vcmp.eq.s32.totalorder %v60, %v97
  %vm104 = vcmp.eq.s32.totalorder %v60, %v100
  %v105 = vsel %vm101, %v31, 0.0
  %v106 = vsel %vm102, %v32, 0.0
  %v107 = vsel %vm103, %v33, 0.0
  %v108 = vsel %vm104, %v34, 0.0
  %109 = vadd.xlane.f32.xlu0 %v105
  %v110 = vpop.xlane.xlu0 %109
  %111 = vadd.xlane.f32.xlu0 %v106
  %v112 = vpop.xlane.xlu0 %111
  %113 = vadd.xlane.f32.xlu0 %v107
  %v114 = vpop.xlane.xlu0 %113
  %115 = vadd.xlane.f32.xlu0 %v108
  %v116 = vpop.xlane.xlu0 %115
  %v117 = vmul.f32 %v15, %v82
  %v118 = vmul.f32 %v16, %v84
  %v119 = vmul.f32 %v17, %v86
  %v120 = vmul.f32 %v18, %v88
  %v121 = vsub.f32 1.0, %v15
  %v122 = vsub.f32 1.0, %v16
  %v123 = vsub.f32 1.0, %v17
  %v124 = vsub.f32 1.0, %v18
  %v125 = vmul.f32 %v121, %v110
  %v126 = vmul.f32 %v122, %v112
  %v127 = vmul.f32 %v123, %v114
  %v128 = vmul.f32 %v124, %v116
  %v129 = vadd.f32 %v117, %v125
  %v130 = vadd.f32 %v118, %v126
  %v131 = vadd.f32 %v119, %v127
  %v132 = vadd.f32 %v120, %v128
  %v133 = vsub.f32 %v52, %v129
  %v134 = vsub.f32 %v54, %v130
  %v135 = vsub.f32 %v56, %v131
  %v136 = vsub.f32 %v58, %v132
  %s137 = smul.u32 0, 32
  %v138 = vlaneseq
  %v139 = vshrl.u32 %v138, 7
  %v140 = vadd.s32 %v139, 8
  %v141 = vadd.s32 %v139, 16
  %v142 = vadd.s32 %v139, 24
  %v143 = vstv %s137
  %v144 = vadd.s32 %v143, %v139
  %v145 = vadd.s32 %v143, %v140
  %v146 = vadd.s32 %v143, %v141
  %v147 = vadd.s32 %v143, %v142
  %vm148 = vcmp.lt.s32.totalorder %v144, 32
  %vm149 = vcmp.lt.s32.totalorder %v145, 32
  %vm150 = vcmp.lt.s32.totalorder %v146, 32
  %vm151 = vcmp.lt.s32.totalorder %v147, 32
  %v152 = vsel %vm148, %v133, 0.0
  %v153 = vsel %vm149, %v134, 0.0
  %v154 = vsel %vm150, %v135, 0.0
  %v155 = vsel %vm151, %v136, 0.0
  %160 = vrot.lane.b32.xlu0 %v152, 126
  %v161 = vpop.permute.xlu0 %160
  %162 = vrot.lane.b32.xlu0 %v153, 126
  %v163 = vpop.permute.xlu0 %162
  %164 = vrot.lane.b32.xlu0 %v154, 126
  %v165 = vpop.permute.xlu0 %164
  %166 = vrot.lane.b32.xlu0 %v155, 126
  %v167 = vpop.permute.xlu0 %166
  %vm172 = vcmask 7168
  %173 = vst.msk [vmem:[%s2] sm:$0xff] %vm172, %v161
  %174 = vst.msk [vmem:[%s2 + $0x8] sm:$0xff] %vm172, %v163
  %175 = vst.msk [vmem:[%s2 + $0x10] sm:$0xff] %vm172, %v165
  %176 = vst.msk [vmem:[%s2 + $0x18] sm:$0xff] %vm172, %v167
  // Predicated region
  $region10: #{tpu_custom_call.1} parent=0 // pred_check
    _
  $region11: #{tpu_custom_call.1} parent=0 // pred_check_branch
    %178 = sbr.rel (0) target = $region13
  $region12: #{tpu_custom_call.1} parent=0 // pred_region
    _
  $region13: #{tpu_custom_call.1} parent=0 // pred_fallthru
    _
  // Predicated region
  $region14: #{tpu_custom_call.1} parent=0 // pred_check
    _
  $region15: #{tpu_custom_call.1} parent=0 // pred_check_branch
    %180 = sbr.rel (0) target = $region17
  $region16: #{tpu_custom_call.1} parent=0 // pred_region
    _
  $region17: #{tpu_custom_call.1} parent=0 // pred_fallthru
    _

</llo_original>
